<compile_context>
chip_gen: v7x
topology: tpu7x:2x2x1
jax: 0.10.0
libtpu: 0.0.40
codegen_flags: <defaults>
</compile_context>

<pallas_src>
import functools

import jax
import jax.numpy as jnp
from jax import lax
from jax.experimental import pallas as pl
from jax.experimental.pallas import tpu as pltpu


_LANE = 128
# Working VMEM budget used for tile sizing (double-buffered F block + resident
# partial Gram), kept under the scoped limit requested below so the same sizing
# works on v5e (16 MiB default, raised), v6e (32 MiB) and v7x (32 of 64 MiB).
_VMEM_SIZING_BUDGET = 24 * 1024 * 1024
_VMEM_LIMIT_BYTES = 32 * 1024 * 1024


def _round_up(x, m):
    return ((x + m - 1) // m) * m


def _cdiv(a, b):
    return -(-a // b)


# ---------------------------------------------------------------------------
# Kernel
# ---------------------------------------------------------------------------

def _partial_gram_kernel(f_ref, g_ref, *, tile_k, tiles_per_split, cols, needs_mask):
    """Accumulate F_block @ F_block.T into this split's VMEM-resident output block."""
    k = pl.program_id(1)

    @pl.when(k == 0)
    def _():
        g_ref[...] = jnp.zeros_like(g_ref)

    f = f_ref[...]  # native dtype straight to the MXU (no f32 upcast)
    if needs_mask:
        # Zero lanes past the true K extent: the ragged last tile and any
        # overhang tiles of an uneven split (whose index_map was clamped).
        start = (pl.program_id(0) * tiles_per_split + k) * tile_k
        lane = lax.broadcasted_iota(jnp.int32, f.shape, 1)
        f = jnp.where(start + lane < cols, f, jnp.zeros_like(f))

    # Contract dim 1 of both operands (trans-B form): lowers as a native MXU
    # matmul, no per-step XLU transpose of the (R, tile_k) block.
    g_ref[...] += lax.dot_general(
        f, f, (((1,), (1,)), ((), ())), preferred_element_type=jnp.float32)


# ---------------------------------------------------------------------------
# Wrappers
# ---------------------------------------------------------------------------

def _choose_tile_k(rows, cols, itemsize):
    """Lane-dense K tile sized by bytes per step, capped by the VMEM budget."""
    if cols <= _LANE:
        return cols                                   # single full-width block
    max_by_cols = (cols // _LANE) * _LANE             # never exceed the array
    # Aim for >= ~2 MiB streamed per grid step (amortize ~0.35us/step overhead).
    want = _round_up(_cdiv(2 * 1024 * 1024, rows * itemsize), _LANE)
    # Leave room for the double-buffered F block next to the resident Gram block.
    avail = max(_VMEM_SIZING_BUDGET - 2 * rows * rows * 4,
                2 * rows * itemsize * _LANE)
    cap = max(_LANE, (avail // (2 * rows * itemsize)) // _LANE * _LANE)
    return max(_LANE, min(want, cap, max_by_cols))


def _partial_gram(feat, *, num_splits=2, tile_k=None):
    """Per-split partial Grams of F = feat.reshape(R, K). Returns ((S, R, R) f32, R, K)."""
    n, c, h, w = feat.shape
    rows, cols = n * c, h * w
    f2d = feat.reshape(rows, cols)                    # free reshape, no HBM pad copy

    itemsize = jnp.dtype(feat.dtype).itemsize
    if tile_k is None:
        tile_k = _choose_tile_k(rows, cols, itemsize)
    tile_k = min(tile_k, cols)
    if tile_k < cols:
        assert tile_k % _LANE == 0, "tile_k must be a multiple of 128 (or cover K)"

    total_tiles = _cdiv(cols, tile_k)
    num_splits = max(1, min(num_splits, total_tiles))
    tiles_per_split = _cdiv(total_tiles, num_splits)
    needs_clamp = num_splits * tiles_per_split > total_tiles
    needs_mask = needs_clamp or (total_tiles * tile_k != cols)
    last_tile = total_tiles - 1

    def f_map(s, k):
        t = s * tiles_per_split + k
        if needs_clamp:
            # Overhang tiles of an uneven split re-read the last valid tile
            # (never a fully out-of-bounds DMA); their lanes are masked to zero.
            t = jnp.minimum(t, last_tile)
        return (0, t)

    kernel = functools.partial(
        _partial_gram_kernel, tile_k=tile_k, tiles_per_split=tiles_per_split,
        cols=cols, needs_mask=needs_mask)

    partials = pl.pallas_call(
        kernel,
        out_shape=jax.ShapeDtypeStruct((num_splits, rows, rows), jnp.float32),
        grid_spec=pltpu.PrefetchScalarGridSpec(
            num_scalar_prefetch=0,
            grid=(num_splits, tiles_per_split),
            in_specs=[pl.BlockSpec((rows, tile_k), f_map)],
            # Split dim squeezed; block index constant along k -> the output
            # block stays VMEM-resident and doubles as the accumulator.
            out_specs=pl.BlockSpec((None, rows, rows), lambda s, k: (s, 0, 0)),
        ),
        compiler_params=pltpu.CompilerParams(
            # Split axis is independent work (sharded across the 2 TCs on v7x);
            # K tiles are the reduction -> "arbitrary", last in the grid.
            dimension_semantics=("parallel", "arbitrary"),
            vmem_limit_bytes=_VMEM_LIMIT_BYTES,
        ),
    )(f2d)
    return partials, rows, cols


def gram_matrix_pallas(feat, *, num_splits=2, tile_k=None):
    """G = F @ F.T / (N*C*H*W), F = feat.reshape(N*C, H*W). Returns (R, R) f32."""
    partials, rows, cols = _partial_gram(feat, num_splits=num_splits, tile_k=tile_k)
    return jnp.sum(partials, axis=0) * (1.0 / float(rows * cols))


def style_loss_forward(x, target_gram, *, num_splits=2, tile_k=None):
    """StyleLoss.forward: loss = mse_loss(gram_matrix(x), target); returns (x, loss)."""
    partials, rows, cols = _partial_gram(x, num_splits=num_splits, tile_k=tile_k)
    g = jnp.sum(partials, axis=0) * (1.0 / float(rows * cols))
    d = g - target_gram.astype(jnp.float32)
    loss = jnp.mean(d * d)                 # tiny (R, R) epilogue; negligible vs. streaming F
    # The module returns its input unchanged; the loss is the side product
    # (nn.Module's `self.loss` attribute has no functional equivalent).
    return x, loss


# ---------------------------------------------------------------------------
# Demo / correctness check
# ---------------------------------------------------------------------------

if __name__ == "__main__":
    key = jax.random.PRNGKey(0)
    k1, k2 = jax.random.split(key)

    N, C, H, W = 2, 4, 16, 16
    x = jax.random.normal(k1, (N, C, H, W), dtype=jnp.float32)
    target_feature = jax.random.normal(k2, (N, C, H, W), dtype=jnp.float32)

    def gram_ref(t):
        n, c, h, w = t.shape
        f = t.reshape(n * c, h * w).astype(jnp.float32)
        g = jnp.dot(f, f.T, precision=jax.lax.Precision.HIGHEST)
        return g / (n * c * h * w)

    # StyleLoss.__init__: target Gram precomputed and "detached".
    target_G = jax.lax.stop_gradient(gram_matrix_pallas(target_feature))

    out, loss = style_loss_forward(x, target_G)
    out, loss = jax.block_until_ready((out, loss))

    ref_loss = jnp.mean((gram_ref(x) - gram_ref(target_feature)) ** 2)
    assert jnp.allclose(loss, ref_loss, rtol=1e-4, atol=1e-6), (loss, ref_loss)
    assert jnp.array_equal(out, x)

    # Exercise the multi-tile + 2-way split reduction path (grid (2, 1)).
    _, loss2 = style_loss_forward(x, target_G, tile_k=128, num_splits=2)
    loss2 = jax.block_until_ready(loss2)
    assert jnp.allclose(loss2, ref_loss, rtol=1e-4, atol=1e-6), (loss2, ref_loss)

    # Exercise the ragged-tail + uneven-split (clamped index_map) path:
    # K = 18*18 = 324 -> 3 tiles of 128, split 2 ways -> one masked overhang tile.
    x3 = jax.random.normal(jax.random.PRNGKey(1), (1, 8, 18, 18), dtype=jnp.float32)
    t3 = jax.random.normal(jax.random.PRNGKey(2), (1, 8, 18, 18), dtype=jnp.float32)
    tg3 = gram_matrix_pallas(t3, tile_k=128, num_splits=2)
    _, loss3 = style_loss_forward(x3, tg3, tile_k=128, num_splits=2)
    loss3 = jax.block_until_ready(loss3)
    ref3 = jnp.mean((gram_ref(x3) - gram_ref(t3)) ** 2)
    assert jnp.allclose(loss3, ref3, rtol=1e-4, atol=1e-6), (loss3, ref3)

    # bf16 feature maps stream at native width / MXU rate (f32 accumulation).
    xb = x.astype(jnp.bfloat16)
    tb = target_feature.astype(jnp.bfloat16)
    tgb = gram_matrix_pallas(tb)
    _, lossb = style_loss_forward(xb, tgb)
    lossb = jax.block_until_ready(lossb)
    refb = jnp.mean((gram_ref(xb) - gram_ref(tb)) ** 2)
    assert jnp.allclose(lossb, refb, rtol=5e-2, atol=1e-4), (lossb, refb)

    print("KERNEL_OK")
</pallas_src>

<mosaic_0001>
module attributes {stable_mosaic.version = 11 : i64} {
  func.func @_partial_gram_kernel(%arg0: i32, %arg1: i32, %arg2: memref<8x256xf32, #tpu.memory_space<vmem>>, %arg3: memref<1x8x8xf32, #tpu.memory_space<vmem>>) attributes {dimension_semantics = [#tpu.dimension_semantics<parallel>, #tpu.dimension_semantics<arbitrary>], iteration_bounds = array<i64: 1, 1>, scalar_prefetch = 0 : i64, scratch_operands = 0 : i64, tpu.core_type = #tpu.core_type<tc>, window_params = [{transform_indices = @transform_0, window_bounds = array<i64: 8, 256>}, {transform_indices = @transform_1, window_bounds = array<i64: 1, 8, 8>}]} {
    %c0_i32 = arith.constant 0 : i32
    %0 = arith.cmpi eq, %arg1, %c0_i32 : i32
    %1 = arith.extui %0 : i1 to i32
    %c0_i32_0 = arith.constant 0 : i32
    %2 = arith.cmpi ne, %1, %c0_i32_0 : i32
    scf.if %2 {
      %cst_8 = arith.constant 0.000000e+00 : f32
      %11 = vector.broadcast %cst_8 : f32 to vector<8x8xf32>
      %c0_9 = arith.constant 0 : index
      %c0_10 = arith.constant 0 : index
      %c0_11 = arith.constant 0 : index
      %12 = vector.load %arg3[%c0_9, %c0_10, %c0_11] : memref<1x8x8xf32, #tpu.memory_space<vmem>>, vector<1x8x8xf32>
      %13 = vector.shape_cast %12 : vector<1x8x8xf32> to vector<8x8xf32>
      %14 = vector.shape_cast %11 : vector<8x8xf32> to vector<1x8x8xf32>
      tpu.vector_store %arg3[%c0_9, %c0_10, %c0_11], %14 {strides = array<i32>} : memref<1x8x8xf32, #tpu.memory_space<vmem>>, vector<1x8x8xf32>,
    } else {
    }
    %c0 = arith.constant 0 : index
    %c0_1 = arith.constant 0 : index
    %3 = vector.load %arg2[%c0, %c0_1] : memref<8x256xf32, #tpu.memory_space<vmem>>, vector<8x256xf32>
    %c0_2 = arith.constant 0 : index
    %c0_3 = arith.constant 0 : index
    %c0_4 = arith.constant 0 : index
    %4 = vector.load %arg3[%c0_2, %c0_3, %c0_4] : memref<1x8x8xf32, #tpu.memory_space<vmem>>, vector<1x8x8xf32>
    %5 = vector.shape_cast %4 : vector<1x8x8xf32> to vector<8x8xf32>
    %cst = arith.constant dense<0.000000e+00> : vector<8x8xf32>
    %6 = tpu.matmul %3, %3, %cst {dimension_numbers = #tpu.dot_dimension_numbers<[1], [1], [0], [0], [0, 0, 1, 0], [], []>} : vector<8x256xf32>, vector<8x256xf32>, vector<8x8xf32> -> vector<8x8xf32>
    %7 = arith.addf %5, %6 : vector<8x8xf32>
    %c0_5 = arith.constant 0 : index
    %c0_6 = arith.constant 0 : index
    %c0_7 = arith.constant 0 : index
    %8 = vector.load %arg3[%c0_5, %c0_6, %c0_7] : memref<1x8x8xf32, #tpu.memory_space<vmem>>, vector<1x8x8xf32>
    %9 = vector.shape_cast %8 : vector<1x8x8xf32> to vector<8x8xf32>
    %10 = vector.shape_cast %7 : vector<8x8xf32> to vector<1x8x8xf32>
    tpu.vector_store %arg3[%c0_5, %c0_6, %c0_7], %10 {strides = array<i32>} : memref<1x8x8xf32, #tpu.memory_space<vmem>>, vector<1x8x8xf32>,
    return
  }
  func.func @transform_0(%arg0: i32, %arg1: i32) -> (i32, i32) {
    %c1_i32 = arith.constant 1 : i32
    %0 = arith.muli %arg0, %c1_i32 : i32
    %1 = arith.addi %0, %arg1 : i32
    %c0_i32 = arith.constant 0 : i32
    %c0_i32_0 = arith.constant 0 : i32
    return %c0_i32, %1 : i32, i32
  }
  func.func @transform_1(%arg0: i32, %arg1: i32) -> (i32, i32, i32) {
    %c0_i32 = arith.constant 0 : i32
    %c0_i32_0 = arith.constant 0 : i32
    %c0_i32_1 = arith.constant 0 : i32
    return %arg0, %c0_i32, %c0_i32_0 : i32, i32, i32
  }
}

</mosaic_0001>

<llo_original>
// kernel: tpu_custom_call.1
$region0: #{tpu_custom_call.1}
  #allocation0 [shape = 'u32[]', space=smem, size = 0x4, offset = 0x4, fixed_abs, tag = 'smem constant byte address 0x4 - core index']
  #allocation1 [shape = 'u32[144,128]{1,0:T(1,128)}', space=vmem, size = 0x12000, scoped, tag = 'internal scratch']
  %s0 = inlined_call_operand.hbm [shape: f32[8,256], index: 0, kind: input, shape index: {}]
  %s1 = inlined_call_operand.hbm [shape: f32[1,8,8], index: 1, kind: output, shape index: {}]
  %s2 = sld [smem:[#allocation0]]
  $region22: #{tpu_custom_call.1} parent=0
    _
  %s4 = ssub.s32 1, %s2
  %s5 = scalar_select 0, %s4, %s2
  $region1: #{tpu_custom_call.1} parent=0
    #allocation2 [shape = 'u8[8192]{0}', space=vmem, size = 0x2000, scoped, tag = 'input window, operand 0, single buffered']
    #allocation3 [shape = 's32[1]{0}', space=sflag, size = 0x4, scoped, tag = 'scoped memory for tpu_custom_call.1']
    #allocation4 [shape = 's32[1]{0}', space=sflag, size = 0x4, scoped, tag = 'scoped memory for tpu_custom_call.1']
    #allocation5 [shape = 'u8[4096]{0}', space=vmem, size = 0x1000, scoped, tag = 'output window, operand 0, single buffered']
    %6 = vsyncpa [#allocation3], 0
    %7 = vsyncpa [#allocation4], 0
    // Predicated region
    $region2: #{tpu_custom_call.1} parent=1 // pred_check
      _
    $region3: #{tpu_custom_call.1} parent=1 // pred_check_branch
      %9 = sbr.rel (0) target = $region5
    $region4: #{tpu_custom_call.1} parent=1 // pred_region
      %s10 = sadd.s32 0, 0
      %s11 = smul.u32 2, %s10
      %s13 = ssub.s32 256, 256
      %14 = vsyncadd [#allocation3], %s13
      %s15 = smul.addr %s11, 128
      %s16 = scalar_lea.hbm %s0, %s15
      %s18 = sshll.u32 [#allocation2], 4
      %s19 = int_to_ptr.vmem [resolvable:$true] %s18
      %21 = dma.hbm_to_vmem [thread:$0]  %s16, 256, %s19, [#allocation3]
    $region5: #{tpu_custom_call.1} parent=1 // pred_fallthru
      _
    // Predicated region
    $region6: #{tpu_custom_call.1} parent=1 // pred_check
      _
    $region7: #{tpu_custom_call.1} parent=1 // pred_check_branch
      %23 = sbr.rel (0) target = $region9
    $region8: #{tpu_custom_call.1} parent=1 // pred_region
      %24 = dma.done [#allocation3], 256
    $region9: #{tpu_custom_call.1} parent=1 // pred_fallthru
      _
    %s25 = sadd.s32 0, 0
    %s26 = smul.u32 2, %s25
    %p27 = scmp.eq.s32.totalorder 0, 0
    // Predicated region
    $region10: #{tpu_custom_call.1} parent=1 // pred_check
      %p28 = pneg %p27
    $region11: #{tpu_custom_call.1} parent=1 // pred_check_branch
      %30 = sbr.rel (%p28) target = $region13
    $region12: #{tpu_custom_call.1} parent=1 // pred_region
      %vm31 = vcmask 64512
      %32 = vst.msk [vmem:[#allocation5] sm:$0xff] %vm31, 0.0
    $region13: #{tpu_custom_call.1} parent=1 // pred_fallthru
      _
    %v33 = vld [vmem:[#allocation2] sm:$0xff]
    %v34 = vld [vmem:[#allocation2 + $0x8] sm:$0xff]
    %v35 = vld [vmem:[#allocation5] sm:$0xff]
    %36 = vmatprep.subr.mxu0 %v34
    %37 = vmatpush1.xpose.msra.mxu0 %v33
    %38 = vmatprep.subr.mxu0 0.0
    %39 = vmatpush1.xpose.msra.mxu0 0.0
    %40 = vmatprep.subr.mxu0 0.0
    %41 = vmatpush1.xpose.msra.mxu0 0.0
    %42 = vmatprep.subr.mxu0 0.0
    %43 = vmatpush1.xpose.msra.mxu0 0.0
    %44 = vmatprep.subr.mxu0 0.0
    %45 = vmatpush1.xpose.msra.mxu0 0.0
    %46 = vmatprep.subr.mxu0 0.0
    %47 = vmatpush1.xpose.msra.mxu0 0.0
    %48 = vmatprep.subr.mxu0 0.0
    %49 = vmatpush1.xpose.msra.mxu0 0.0
    %50 = vmatprep.subr.mxu0 0.0
    %51 = vmatpush1.xpose.msra.mxu0 0.0
    %52 = vmatprep.subr.mxu0 0.0
    %53 = vmatpush1.xpose.msra.mxu0 0.0
    %54 = vmatprep.subr.mxu0 0.0
    %55 = vmatpush1.xpose.msra.mxu0 0.0
    %56 = vmatprep.subr.mxu0 0.0
    %57 = vmatpush1.xpose.msra.mxu0 0.0
    %58 = vmatprep.subr.mxu0 0.0
    %59 = vmatpush1.xpose.msra.mxu0 0.0
    %60 = vmatprep.subr.mxu0 0.0
    %61 = vmatpush1.xpose.msra.mxu0 0.0
    %62 = vmatprep.subr.mxu0 0.0
    %63 = vmatpush1.xpose.msra.mxu0 0.0
    %64 = vmatprep.subr.mxu0 0.0
    %65 = vmatpush1.xpose.msra.mxu0 0.0
    %66 = vmatprep.subr.mxu0 0.0
    %67 = vmatpush1.xpose.msra.mxu0 0.0
    %68 = vmatprep.subr.mxu0 0.0
    %69 = vmatpush1.xpose.msra.mxu0 0.0
    %70 = vmatprep.subr.mxu0 0.0
    %71 = vmatpush1.xpose.msra.mxu0 0.0
    %72 = vmatprep.subr.mxu0 0.0
    %73 = vmatpush1.xpose.msra.mxu0 0.0
    %74 = vmatprep.subr.mxu0 0.0
    %75 = vmatpush1.xpose.msra.mxu0 0.0
    %76 = vmatprep.subr.mxu0 0.0
    %77 = vmatpush1.xpose.msra.mxu0 0.0
    %78 = vmatprep.subr.mxu0 0.0
    %79 = vmatpush1.xpose.msra.mxu0 0.0
    %80 = vmatprep.subr.mxu0 0.0
    %81 = vmatpush1.xpose.msra.mxu0 0.0
    %82 = vmatprep.subr.mxu0 0.0
    %83 = vmatpush1.xpose.msra.mxu0 0.0
    %84 = vmatprep.subr.mxu0 0.0
    %85 = vmatpush1.xpose.msra.mxu0 0.0
    %86 = vmatprep.subr.mxu0 0.0
    %87 = vmatpush1.xpose.msra.mxu0 0.0
    %88 = vmatprep.subr.mxu0 0.0
    %89 = vmatpush1.xpose.msra.mxu0 0.0
    %90 = vmatprep.subr.mxu0 0.0
    %91 = vmatpush1.xpose.msra.mxu0 0.0
    %92 = vmatprep.subr.mxu0 0.0
    %93 = vmatpush1.xpose.msra.mxu0 0.0
    %94 = vmatprep.subr.mxu0 0.0
    %95 = vmatpush1.xpose.msra.mxu0 0.0
    %96 = vmatprep.subr.mxu0 0.0
    %97 = vmatpush1.xpose.msra.mxu0 0.0
    %98 = vmatprep.subr.mxu0 0.0
    %99 = vmatpush1.xpose.msra.mxu0 0.0
    %100 = vmatprep.mubr.f32.mxu0 %v34
    %101 = vmatmul.mubr.f32.gmra.mrb[0].mxu0 %v33
    %v102 = vpop.f32.mrb[0].mxu0
    %v103 = vadd.f32 0.0, %v102
    %v104 = vpop.f32.mrb[0].mxu0
    %105 = vdwg.mxu0
    %v106 = vadd.f32 %v35, %v103
    %vm107 = vcmask 64512
    %108 = vst.msk [vmem:[#allocation5] sm:$0xff] %vm107, %v106
    // Predicated region
    $region14: #{tpu_custom_call.1} parent=1 // pred_check
      _
    $region15: #{tpu_custom_call.1} parent=1 // pred_check_branch
      %110 = sbr.rel (0) target = $region17
    $region16: #{tpu_custom_call.1} parent=1 // pred_region
      %s112 = ssub.s32 128, 128
      %113 = vsyncadd [#allocation4], %s112
      %s115 = sshll.u32 [#allocation5], 4
      %s116 = int_to_ptr.vmem [resolvable:$true] %s115
      %118 = dma.vmem_to_hbm [thread:$0]  %s116, 128, %s1, [#allocation4]
    $region17: #{tpu_custom_call.1} parent=1 // pred_fallthru
      _
    // Predicated region
    $region18: #{tpu_custom_call.1} parent=1 // pred_check
      _
    $region19: #{tpu_custom_call.1} parent=1 // pred_check_branch
      %120 = sbr.rel (0) target = $region21
    $region20: #{tpu_custom_call.1} parent=1 // pred_region
      %121 = dma.done [#allocation4], 128
    $region21: #{tpu_custom_call.1} parent=1 // pred_fallthru
      _
    %122 = vsyncpa [#allocation3], 1
    %123 = vsyncpa [#allocation4], 1

</llo_original>
